<compile_context>
chip_gen: v6e
topology: v6e:2x2x1
jax: 0.10.0
libtpu: 0.0.40
codegen_flags: <defaults>
</compile_context>

<pallas_src>
import math

import jax
import jax.numpy as jnp
from jax.experimental import pallas as pl
from jax.experimental.pallas import tpu as pltpu


def _round_up(x, m):
    return ((x + m - 1) // m) * m


def _pick_tile(size, max_tile, align):
    """Aligned tile <= max_tile that minimises padding waste of `size`."""
    size_a = _round_up(size, align)
    if size_a <= max_tile:
        return size_a
    n_tiles = -(-size_a // max_tile)                  # ceil
    return _round_up(-(-size_a // n_tiles), align)    # ceil-split, then align


def _linear_kernel(x_ref, w_ref, b_ref, o_ref, acc_ref):
    # x_ref  : (tm, tk)  activation tile
    # w_ref  : (tk, tn)  weight tile, already (K, N) -> MXU-native contraction,
    #                    no per-step transpose on the XLU
    # b_ref  : (1,  tn)  bias tile
    # o_ref  : (tm, tn)  output tile
    # acc_ref: (tm, tn)  f32 accumulator scratch, persists across the K grid axis
    k = pl.program_id(2)
    part = jnp.dot(x_ref[...], w_ref[...], preferred_element_type=jnp.float32)

    @pl.when(k == 0)
    def _first():
        # Overwrite on the first K step: saves one full (tm, tn) VMEM read-modify-write.
        acc_ref[...] = part

    @pl.when(k != 0)
    def _accumulate():
        acc_ref[...] += part

    @pl.when(k == pl.num_programs(2) - 1)
    def _finalize():
        o_ref[...] = (acc_ref[...] + b_ref[...].astype(jnp.float32)).astype(o_ref.dtype)


# Tile caps: at tm=tn=tk=1024 (f32) the pipeline footprint is
#   2*(tm*tk) + 2*(tk*tn) + 2*(tm*tn) + (tm*tn) words * 4 B  ~= 28 MiB
# which fits the 40 MiB scoped limit below and leaves headroom on v7x's 64 MiB VMEM/TC.
_TM_MAX, _TN_MAX, _TK_MAX = 1024, 1024, 1024
_VMEM_LIMIT_BYTES = 40 * 1024 * 1024


@jax.jit
def classifier_forward(x, weight, bias):
    """Equivalent of Classifier.forward.

    x      : (bz, nr, dim_in)
    weight : (num_class, dim_in)   (PyTorch nn.Linear convention)
    bias   : (num_class,)
    returns: (bz, nr, num_class)
    """
    bz, nr, dim = x.shape
    num_class = weight.shape[0]
    M, K, N = bz * nr, dim, num_class

    tm = _pick_tile(M, _TM_MAX, 8)      # sublane-aligned (f32 => multiples of 8)
    tn = _pick_tile(N, _TN_MAX, 128)    # lane-aligned
    tk = _pick_tile(K, _TK_MAX, 128)
    M_pad, N_pad, K_pad = _round_up(M, tm), _round_up(N, tn), _round_up(K, tk)

    # Pad to tile multiples. Zeros are inert in the contraction; padded output
    # rows/cols are sliced off below. Lane-dense N_pad output => unmasked stores.
    x_flat = x.reshape(M, K)
    if (M_pad, K_pad) != (M, K):
        x_flat = jnp.pad(x_flat, ((0, M_pad - M), (0, K_pad - K)))

    # One-time HBM transpose to (K, N) so the inner loop is pure vmatmul+accumulate.
    w_t = weight.T
    if (K_pad, N_pad) != (K, N):
        w_t = jnp.pad(w_t, ((0, K_pad - K), (0, N_pad - N)))

    b_row = bias.reshape(1, N)
    if N_pad != N:
        b_row = jnp.pad(b_row, ((0, 0), (0, N_pad - N)))

    gm, gn, gk = M_pad // tm, N_pad // tn, K_pad // tk
    itemsize = jnp.dtype(x.dtype).itemsize
    cost = pl.CostEstimate(
        flops=2 * M_pad * K_pad * N_pad,
        transcendentals=0,
        bytes_accessed=itemsize * (M_pad * K_pad * gn      # x re-read per N tile
                                   + K_pad * N_pad * gm    # weight re-read per M tile
                                   + M_pad * N_pad),
    )

    z_flat = pl.pallas_call(
        _linear_kernel,
        out_shape=jax.ShapeDtypeStruct((M_pad, N_pad), x.dtype),
        grid_spec=pltpu.PrefetchScalarGridSpec(
            num_scalar_prefetch=0,
            grid=(gm, gn, gk),
            in_specs=[
                pl.BlockSpec((tm, tk), lambda i, j, k: (i, k)),   # x tile
                pl.BlockSpec((tk, tn), lambda i, j, k: (k, j)),   # weight tile (K, N)
                pl.BlockSpec((1, tn), lambda i, j, k: (0, j)),    # bias tile (N only)
            ],
            out_specs=pl.BlockSpec((tm, tn), lambda i, j, k: (i, j)),
            scratch_shapes=[pltpu.VMEM((tm, tn), jnp.float32)],
        ),
        compiler_params=pltpu.CompilerParams(
            dimension_semantics=("parallel", "parallel", "arbitrary"),
            vmem_limit_bytes=_VMEM_LIMIT_BYTES,
        ),
        cost_estimate=cost,
    )(x_flat, w_t, b_row)

    if (M_pad, N_pad) != (M, N):
        z_flat = z_flat[:M, :N]
    return z_flat.reshape(bz, nr, N)


if __name__ == "__main__":
    # --- small demo matching the module's forward: x is (bz, nr, dim_in) ---
    bz, nr, dim_in, num_class = 2, 8, 32, 16
    key = jax.random.PRNGKey(0)
    kx, kw, kb = jax.random.split(key, 3)

    x = jax.random.normal(kx, (bz, nr, dim_in), dtype=jnp.float32)
    bound = 1.0 / math.sqrt(dim_in)   # mimics nn.Linear's uniform init range
    weight = jax.random.uniform(kw, (num_class, dim_in), jnp.float32, -bound, bound)
    bias = jax.random.uniform(kb, (num_class,), jnp.float32, -bound, bound)

    z = classifier_forward(x, weight, bias)
    jax.block_until_ready(z)

    z_ref = (jnp.matmul(x.reshape(bz * nr, dim_in), weight.T, precision="highest")
             + bias).reshape(bz, nr, num_class)
    assert z.shape == (bz, nr, num_class)
    assert jnp.allclose(z, z_ref, atol=1e-5, rtol=1e-5)

    # --- second check: multi-step K grid (K > tk cap => real accumulator path) ---
    bz2, nr2, dim2, nc2 = 4, 64, 2176, 384
    k2 = jax.random.PRNGKey(1)
    kx2, kw2, kb2 = jax.random.split(k2, 3)
    x2 = jax.random.normal(kx2, (bz2, nr2, dim2), dtype=jnp.float32)
    bound2 = 1.0 / math.sqrt(dim2)
    w2 = jax.random.uniform(kw2, (nc2, dim2), jnp.float32, -bound2, bound2)
    b2 = jax.random.uniform(kb2, (nc2,), jnp.float32, -bound2, bound2)

    z2 = classifier_forward(x2, w2, b2)
    jax.block_until_ready(z2)
    z2_ref = (jnp.matmul(x2.reshape(bz2 * nr2, dim2), w2.T, precision="highest")
              + b2).reshape(bz2, nr2, nc2)
    assert z2.shape == (bz2, nr2, nc2)
    assert jnp.allclose(z2, z2_ref, atol=2e-3, rtol=2e-3)

    print("KERNEL_OK")
</pallas_src>

<mosaic_0001>
module attributes {stable_mosaic.version = 11 : i64} {
  func.func @_linear_kernel(%arg0: i32, %arg1: i32, %arg2: i32, %arg3: memref<16x128xf32, #tpu.memory_space<vmem>>, %arg4: memref<128x128xf32, #tpu.memory_space<vmem>>, %arg5: memref<1x128xf32, #tpu.memory_space<vmem>>, %arg6: memref<16x128xf32, #tpu.memory_space<vmem>>, %arg7: memref<16x128xf32, #tpu.memory_space<vmem>>) attributes {dimension_semantics = [#tpu.dimension_semantics<parallel>, #tpu.dimension_semantics<parallel>, #tpu.dimension_semantics<arbitrary>], iteration_bounds = array<i64: 1, 1, 1>, scalar_prefetch = 0 : i64, scratch_operands = 1 : i64, tpu.core_type = #tpu.core_type<tc>, window_params = [{transform_indices = @transform_0, window_bounds = array<i64: 16, 128>}, {transform_indices = @transform_1, window_bounds = array<i64: 128, 128>}, {transform_indices = @transform_2, window_bounds = array<i64: 1, 128>}, {transform_indices = @transform_3, window_bounds = array<i64: 16, 128>}]} {
    %c0 = arith.constant 0 : index
    %c0_0 = arith.constant 0 : index
    %0 = vector.load %arg3[%c0, %c0_0] : memref<16x128xf32, #tpu.memory_space<vmem>>, vector<16x128xf32>
    %c0_1 = arith.constant 0 : index
    %c0_2 = arith.constant 0 : index
    %1 = vector.load %arg4[%c0_1, %c0_2] : memref<128x128xf32, #tpu.memory_space<vmem>>, vector<128x128xf32>
    %cst = arith.constant dense<0.000000e+00> : vector<16x128xf32>
    %2 = tpu.matmul %0, %1, %cst {dimension_numbers = #tpu.dot_dimension_numbers<[1], [0], [0], [1], [0, 0, 1, 1], [], []>} : vector<16x128xf32>, vector<128x128xf32>, vector<16x128xf32> -> vector<16x128xf32>
    %c0_i32 = arith.constant 0 : i32
    %3 = arith.cmpi eq, %arg2, %c0_i32 : i32
    %4 = arith.extui %3 : i1 to i32
    %c0_i32_3 = arith.constant 0 : i32
    %5 = arith.cmpi ne, %4, %c0_i32_3 : i32
    scf.if %5 {
      %c0_8 = arith.constant 0 : index
      %c0_9 = arith.constant 0 : index
      %12 = vector.load %arg7[%c0_8, %c0_9] : memref<16x128xf32, #tpu.memory_space<vmem>>, vector<16x128xf32>
      tpu.vector_store %arg7[%c0_8, %c0_9], %2 {strides = array<i32>} : memref<16x128xf32, #tpu.memory_space<vmem>>, vector<16x128xf32>,
    } else {
    }
    %c0_i32_4 = arith.constant 0 : i32
    %6 = arith.cmpi ne, %arg2, %c0_i32_4 : i32
    %7 = arith.extui %6 : i1 to i32
    %c0_i32_5 = arith.constant 0 : i32
    %8 = arith.cmpi ne, %7, %c0_i32_5 : i32
    scf.if %8 {
      %c0_8 = arith.constant 0 : index
      %c0_9 = arith.constant 0 : index
      %12 = vector.load %arg7[%c0_8, %c0_9] : memref<16x128xf32, #tpu.memory_space<vmem>>, vector<16x128xf32>
      %13 = arith.addf %12, %2 : vector<16x128xf32>
      %c0_10 = arith.constant 0 : index
      %c0_11 = arith.constant 0 : index
      %14 = vector.load %arg7[%c0_10, %c0_11] : memref<16x128xf32, #tpu.memory_space<vmem>>, vector<16x128xf32>
      tpu.vector_store %arg7[%c0_10, %c0_11], %13 {strides = array<i32>} : memref<16x128xf32, #tpu.memory_space<vmem>>, vector<16x128xf32>,
    } else {
    }
    %c0_i32_6 = arith.constant 0 : i32
    %9 = arith.cmpi eq, %arg2, %c0_i32_6 : i32
    %10 = arith.extui %9 : i1 to i32
    %c0_i32_7 = arith.constant 0 : i32
    %11 = arith.cmpi ne, %10, %c0_i32_7 : i32
    scf.if %11 {
      %c0_8 = arith.constant 0 : index
      %c0_9 = arith.constant 0 : index
      %12 = vector.load %arg7[%c0_8, %c0_9] : memref<16x128xf32, #tpu.memory_space<vmem>>, vector<16x128xf32>
      %c0_10 = arith.constant 0 : index
      %c0_11 = arith.constant 0 : index
      %13 = vector.load %arg5[%c0_10, %c0_11] : memref<1x128xf32, #tpu.memory_space<vmem>>, vector<1x128xf32>
      %14 = vector.broadcast %13 : vector<1x128xf32> to vector<16x128xf32>
      %15 = arith.addf %12, %14 : vector<16x128xf32>
      %c0_12 = arith.constant 0 : index
      %c0_13 = arith.constant 0 : index
      %16 = vector.load %arg6[%c0_12, %c0_13] : memref<16x128xf32, #tpu.memory_space<vmem>>, vector<16x128xf32>
      tpu.vector_store %arg6[%c0_12, %c0_13], %15 {strides = array<i32>} : memref<16x128xf32, #tpu.memory_space<vmem>>, vector<16x128xf32>,
    } else {
    }
    return
  }
  func.func @transform_0(%arg0: i32, %arg1: i32, %arg2: i32) -> (i32, i32) {
    %c0_i32 = arith.constant 0 : i32
    return %arg0, %arg2 : i32, i32
  }
  func.func @transform_1(%arg0: i32, %arg1: i32, %arg2: i32) -> (i32, i32) {
    %c0_i32 = arith.constant 0 : i32
    return %arg2, %arg1 : i32, i32
  }
  func.func @transform_2(%arg0: i32, %arg1: i32, %arg2: i32) -> (i32, i32) {
    %c0_i32 = arith.constant 0 : i32
    %c0_i32_0 = arith.constant 0 : i32
    return %c0_i32, %arg1 : i32, i32
  }
  func.func @transform_3(%arg0: i32, %arg1: i32, %arg2: i32) -> (i32, i32) {
    %c0_i32 = arith.constant 0 : i32
    return %arg0, %arg1 : i32, i32
  }
}

</mosaic_0001>

<llo_original>
// kernel: classifier_forward.1
$region0: #{classifier_forward.1}
  #allocation0 [shape = 'u32[]', space=smem, size = 0x4, offset = 0x4, fixed_abs, tag = 'smem constant byte address 0x4 - core index']
  #allocation1 [shape = 'u32[144,128]{1,0:T(1,128)}', space=vmem, size = 0x12000, scoped, tag = 'internal scratch']
  #allocation2 [shape = 'f32[16,128]{1,0:T(8,128)}', space=vmem, size = 0x2000, scoped, tag = 'scratch operand']
  %s0 = inlined_call_operand.vmem [shape: f32[16,128], index: 0, kind: input, shape index: {}]
  %s1 = inlined_call_operand.vmem [shape: f32[128,128], index: 1, kind: input, shape index: {}]
  %s2 = inlined_call_operand.vmem [shape: f32[1,128], index: 2, kind: input, shape index: {}]
  %s3 = inlined_call_operand.vmem [shape: f32[16,128], index: 3, kind: output, shape index: {}]
  %s4 = sld [smem:[#allocation0]]
  $region34: #{classifier_forward.1} parent=0
    _
  %s6 = ssub.s32 1, %s4
  %s7 = scalar_select 0, %s6, %s4
  // Predicated region
  $region2: #{classifier_forward.1} parent=0 // pred_check
    _
  $region3: #{classifier_forward.1} parent=0 // pred_check_branch
    %9 = sbr.rel (0) target = $region5
  $region4: #{classifier_forward.1} parent=0 // pred_region
    _
  $region5: #{classifier_forward.1} parent=0 // pred_fallthru
    _
  // Predicated region
  $region6: #{classifier_forward.1} parent=0 // pred_check
    _
  $region7: #{classifier_forward.1} parent=0 // pred_check_branch
    %11 = sbr.rel (0) target = $region9
  $region8: #{classifier_forward.1} parent=0 // pred_region
    _
  $region9: #{classifier_forward.1} parent=0 // pred_fallthru
    _
  // Predicated region
  $region10: #{classifier_forward.1} parent=0 // pred_check
    _
  $region11: #{classifier_forward.1} parent=0 // pred_check_branch
    %13 = sbr.rel (0) target = $region13
  $region12: #{classifier_forward.1} parent=0 // pred_region
    _
  $region13: #{classifier_forward.1} parent=0 // pred_fallthru
    _
  %v14 = vld [vmem:[%s0] sm:$0xff]
  %v15 = vld [vmem:[%s0 + $0x8] sm:$0xff]
  %v16 = vld [vmem:[%s1] sm:$0xff]
  %v17 = vld [vmem:[%s1 + $0x8] sm:$0xff]
  %v18 = vld [vmem:[%s1 + $0x10] sm:$0xff]
  %v19 = vld [vmem:[%s1 + $0x18] sm:$0xff]
  %v20 = vld [vmem:[%s1 + $0x20] sm:$0xff]
  %v21 = vld [vmem:[%s1 + $0x28] sm:$0xff]
  %v22 = vld [vmem:[%s1 + $0x30] sm:$0xff]
  %v23 = vld [vmem:[%s1 + $0x38] sm:$0xff]
  %v24 = vld [vmem:[%s1 + $0x40] sm:$0xff]
  %v25 = vld [vmem:[%s1 + $0x48] sm:$0xff]
  %v26 = vld [vmem:[%s1 + $0x50] sm:$0xff]
  %v27 = vld [vmem:[%s1 + $0x58] sm:$0xff]
  %v28 = vld [vmem:[%s1 + $0x60] sm:$0xff]
  %v29 = vld [vmem:[%s1 + $0x68] sm:$0xff]
  %v30 = vld [vmem:[%s1 + $0x70] sm:$0xff]
  %v31 = vld [vmem:[%s1 + $0x78] sm:$0xff]
  %32 = vmatprep.subr.mxu0 0.0
  %33 = vmatpush1.msra.mxu0 %v31
  %34 = vmatprep.subr.mxu0 0.0
  %35 = vmatpush1.msra.mxu0 %v30
  %36 = vmatprep.subr.mxu0 0.0
  %37 = vmatpush1.msra.mxu0 %v29
  %38 = vmatprep.subr.mxu0 0.0
  %39 = vmatpush1.msra.mxu0 %v28
  %40 = vmatprep.subr.mxu0 0.0
  %41 = vmatpush1.msra.mxu0 %v27
  %42 = vmatprep.subr.mxu0 0.0
  %43 = vmatpush1.msra.mxu0 %v26
  %44 = vmatprep.subr.mxu0 0.0
  %45 = vmatpush1.msra.mxu0 %v25
  %46 = vmatprep.subr.mxu0 0.0
  %47 = vmatpush1.msra.mxu0 %v24
  %48 = vmatprep.subr.mxu0 0.0
  %49 = vmatpush1.msra.mxu0 %v23
  %50 = vmatprep.subr.mxu0 0.0
  %51 = vmatpush1.msra.mxu0 %v22
  %52 = vmatprep.subr.mxu0 0.0
  %53 = vmatpush1.msra.mxu0 %v21
  %54 = vmatprep.subr.mxu0 0.0
  %55 = vmatpush1.msra.mxu0 %v20
  %56 = vmatprep.subr.mxu0 0.0
  %57 = vmatpush1.msra.mxu0 %v19
  %58 = vmatprep.subr.mxu0 0.0
  %59 = vmatpush1.msra.mxu0 %v18
  %60 = vmatprep.subr.mxu0 0.0
  %61 = vmatpush1.msra.mxu0 %v17
  %62 = vmatprep.subr.mxu0 0.0
  %63 = vmatpush1.msra.mxu0 %v16
  %64 = vmatprep.subr.mxu0 0.0
  %65 = vmatpush2.msra.mxu0 0.0
  %66 = vmatprep.subr.mxu0 0.0
  %67 = vmatpush2.msra.mxu0 0.0
  %68 = vmatprep.subr.mxu0 0.0
  %69 = vmatpush2.msra.mxu0 0.0
  %70 = vmatprep.subr.mxu0 0.0
  %71 = vmatpush2.msra.mxu0 0.0
  %72 = vmatprep.subr.mxu0 0.0
  %73 = vmatpush2.msra.mxu0 0.0
  %74 = vmatprep.subr.mxu0 0.0
  %75 = vmatpush2.msra.mxu0 0.0
  %76 = vmatprep.subr.mxu0 0.0
  %77 = vmatpush2.msra.mxu0 0.0
  %78 = vmatprep.subr.mxu0 0.0
  %79 = vmatpush2.msra.mxu0 0.0
  %80 = vmatprep.subr.mxu0 0.0
  %81 = vmatpush2.msra.mxu0 0.0
  %82 = vmatprep.subr.mxu0 0.0
  %83 = vmatpush2.msra.mxu0 0.0
  %84 = vmatprep.subr.mxu0 0.0
  %85 = vmatpush2.msra.mxu0 0.0
  %86 = vmatprep.subr.mxu0 0.0
  %87 = vmatpush2.msra.mxu0 0.0
  %88 = vmatprep.subr.mxu0 0.0
  %89 = vmatpush2.msra.mxu0 0.0
  %90 = vmatprep.subr.mxu0 0.0
  %91 = vmatpush2.msra.mxu0 0.0
  %92 = vmatprep.subr.mxu0 0.0
  %93 = vmatpush2.msra.mxu0 0.0
  %94 = vmatprep.subr.mxu0 0.0
  %95 = vmatpush2.msra.mxu0 0.0
  %96 = vmatprep.mubr.f32.mxu0 0.0
  %97 = vmatmul.mubr.f32.gmra.mxu0 %v14
  %v98 = vpop.f32.mrf.mxu0
  %v99 = vadd.f32 0.0, %v98
  %v100 = vpop.f32.mrf.mxu0
  %101 = vmatprep.mubr.f32.mxu0 0.0
  %102 = vmatmul.mubr.f32.gmra.mxu0 %v15
  %v103 = vpop.f32.mrf.mxu0
  %v104 = vadd.f32 0.0, %v103
  %v105 = vpop.f32.mrf.mxu0
  %106 = vdwg.mxu0
  %p107 = scmp.eq.s32.totalorder 0, 0
  // Predicated region
  $region14: #{classifier_forward.1} parent=0 // pred_check
    %p108 = pneg %p107
  $region15: #{classifier_forward.1} parent=0 // pred_check_branch
    %110 = sbr.rel (%p108) target = $region17
  $region16: #{classifier_forward.1} parent=0 // pred_region
    %111 = vst [vmem:[#allocation2] sm:$0xff] %v99
    %112 = vst [vmem:[#allocation2 + $0x8] sm:$0xff] %v104
  $region17: #{classifier_forward.1} parent=0 // pred_fallthru
    _
  %p113 = scmp.ne.s32.totalorder 0, 0
  // Predicated region
  $region18: #{classifier_forward.1} parent=0 // pred_check
    %p114 = pneg %p113
  $region19: #{classifier_forward.1} parent=0 // pred_check_branch
    %116 = sbr.rel (%p114) target = $region21
  $region20: #{classifier_forward.1} parent=0 // pred_region
    %v117 = vld [vmem:[#allocation2] sm:$0xff]
    %v118 = vld [vmem:[#allocation2 + $0x8] sm:$0xff]
    %v119 = vadd.f32 %v117, %v99
    %v120 = vadd.f32 %v118, %v104
    %121 = vst [vmem:[#allocation2] sm:$0xff] %v119
    %122 = vst [vmem:[#allocation2 + $0x8] sm:$0xff] %v120
  $region21: #{classifier_forward.1} parent=0 // pred_fallthru
    _
  // Predicated region
  $region22: #{classifier_forward.1} parent=0 // pred_check
    %p123 = pneg %p107
  $region23: #{classifier_forward.1} parent=0 // pred_check_branch
    %125 = sbr.rel (%p123) target = $region25
  $region24: #{classifier_forward.1} parent=0 // pred_region
    %v126 = vld [vmem:[#allocation2] sm:$0xff]
    %v127 = vld [vmem:[#allocation2 + $0x8] sm:$0xff]
    %v128 = vld [vmem:[%s2] sm:$0x1]
    %v130 = vlaneseq
    %v131 = vshrl.u32 %v130, 7
    %v132 = vsub.s32 0, %v131
    %v133 = vrot.slane %v128, %v132
    %v135 = vadd.f32 %v126, %v133
    %v136 = vadd.f32 %v127, %v133
    %137 = vst [vmem:[%s3] sm:$0xff] %v135
    %138 = vst [vmem:[%s3 + $0x8] sm:$0xff] %v136
  $region25: #{classifier_forward.1} parent=0 // pred_fallthru
    _
  // Predicated region
  $region26: #{classifier_forward.1} parent=0 // pred_check
    _
  $region27: #{classifier_forward.1} parent=0 // pred_check_branch
    %140 = sbr.rel (0) target = $region29
  $region28: #{classifier_forward.1} parent=0 // pred_region
    _
  $region29: #{classifier_forward.1} parent=0 // pred_fallthru
    _
  // Predicated region
  $region30: #{classifier_forward.1} parent=0 // pred_check
    _
  $region31: #{classifier_forward.1} parent=0 // pred_check_branch
    %142 = sbr.rel (0) target = $region33
  $region32: #{classifier_forward.1} parent=0 // pred_region
    _
  $region33: #{classifier_forward.1} parent=0 // pred_fallthru
    _

</llo_original>
